<compile_context>
chip_gen: v6e
topology: v6e:2x2x1
jax: 0.10.0
libtpu: 0.0.40
codegen_flags: <defaults>
</compile_context>

<pallas_src>
import jax
import jax.numpy as jnp
from jax import lax
from jax.experimental import pallas as pl
from jax.experimental.pallas import tpu as pltpu


def _round_up(x, m):
    return ((x + m - 1) // m) * m


def _choose_token_tile(seq_len, embed, bytes_per_elem=4):
    """Largest multiple-of-8 token tile keeping ~5 live (tile, E) copies
    (pos double-buffer + out double/triple-buffer) under a budget that is safe
    on every generation (v7x only has 64 MiB physical VMEM per TensorCore)."""
    budget = 16 * 1024 * 1024
    cap = max(8, budget // (5 * embed * bytes_per_elem))
    tile = min(1024, cap, _round_up(seq_len, 8))
    return max(8, (tile // 8) * 8)


# ---------------------------------------------------------------------------
# Fast path: token table resident in VMEM, in-kernel row gather.
# ---------------------------------------------------------------------------
def _make_vmem_gather_kernel(s_pad, tile):
    n_grp = tile // 8

    def kernel(ids_ref, tok_ref, pos_ref, out_ref):
        # ids_ref: SMEM (B*S_pad,) i32  | tok_ref: VMEM (V, E) | pos_ref: VMEM (tile, E)
        # out_ref: VMEM (1, tile, E)
        j = pl.program_id(0)              # token-tile index (outer grid axis)
        b = pl.program_id(1)              # batch index (inner grid axis)
        base = b * s_pad + j * tile

        def gather_group(g, r0):
            # Gather 8 rows, assemble a sublane-dense (8, E) block, add pos,
            # store one aligned (8, E) slab (lane-dense, unmasked store).
            rows = [
                tok_ref[pl.ds(ids_ref[base + g * 8 + t], 1), :]
                for t in range(8)
            ]
            blk = jnp.concatenate(rows, axis=0)
            out_ref[0, pl.ds(r0, 8), :] = blk + pos_ref[pl.ds(r0, 8), :]

        if n_grp <= 4:
            for g in range(n_grp):                      # small: fully static
                gather_group(g, g * 8)
        else:
            def body(g, carry):
                gather_group(g, pl.multiple_of(g * 8, 8))
                return carry
            lax.fori_loop(0, n_grp, body, 0, unroll=8)

    return kernel


# ---------------------------------------------------------------------------
# Large-table path: HBM-resident table, double-buffered sub-tile row-gather DMAs.
# ---------------------------------------------------------------------------
def _make_hbm_gather_kernel(s_pad, tile, sub):
    n_sub = tile // sub

    def kernel(ids_ref, tok_hbm_ref, pos_ref, out_ref, row_buf, copy_sems):
        # ids_ref: SMEM (B*S_pad,) i32 | tok_hbm_ref: HBM (V, E) | pos_ref: VMEM (tile, E)
        # out_ref: VMEM (1, tile, E)   | row_buf: VMEM (2, sub, E) | copy_sems: DMA (2, sub)
        j = pl.program_id(0)
        b = pl.program_id(1)
        base = b * s_pad + j * tile

        def issue(s, slot):
            # One row-gather DMA per token of sub-tile `s` into row_buf[slot].
            for t in range(sub):
                tok_id = ids_ref[base + s * sub + t]
                pltpu.make_async_copy(
                    tok_hbm_ref.at[tok_id], row_buf.at[slot, t],
                    copy_sems.at[slot, t],
                ).start()

        def wait(slot):
            for t in range(sub):
                # Placeholder source row 0: only the (E,) dst shape matters here.
                pltpu.make_async_copy(
                    tok_hbm_ref.at[0], row_buf.at[slot, t],
                    copy_sems.at[slot, t],
                ).wait()

        issue(0, 0)                                     # prime slot 0

        @pl.loop(0, n_sub)
        def _(s):
            slot = s & 1
            # Issue the NEXT sub-tile's gathers before waiting on this one, so the
            # HBM gather latency overlaps the pos-add + store below.
            @pl.when(s + 1 < n_sub)
            def _():
                issue(s + 1, 1 - slot)
            wait(slot)
            r0 = pl.multiple_of(s * sub, sub)
            out_ref[0, pl.ds(r0, sub), :] = (
                row_buf[slot] + pos_ref[pl.ds(r0, sub), :]
            )

    return kernel


_SMALL_TABLE_BYTES = 4 * 1024 * 1024    # keep the token table VMEM-resident below this


def embedding_layer(x, tok_table, pos_table, *, force_hbm_gather=False):
    """x: (B, S) int ids; tok_table: (V, E); pos_table: (max_len, E) -> (B, S, E)."""
    B, S = x.shape
    V, E = tok_table.shape
    max_len, _ = pos_table.shape
    assert S <= max_len, "sequence length exceeds max_len of position embedding"

    tile = _choose_token_tile(S, E, tok_table.dtype.itemsize)
    s_pad = _round_up(S, tile)
    sub = 16 if tile % 16 == 0 else 8
    sub = min(sub, tile)

    # Pad ids (with valid id 0) and the positional rows up to s_pad so every block
    # is (8, 128)-aligned; padded rows are sliced off after the call.
    ids = x.astype(jnp.int32)
    pos = pos_table[:S].astype(tok_table.dtype)
    if s_pad != S:
        ids = jnp.pad(ids, ((0, 0), (0, s_pad - S)))
        pos = jnp.pad(pos, ((0, s_pad - S), (0, 0)))
    ids_flat = ids.reshape(B * s_pad)
    # NOTE: ids live in SMEM; for extremely long B*S (>~200K tokens) chunk the call.

    use_vmem_table = (not force_hbm_gather) and (
        V * E * tok_table.dtype.itemsize <= _SMALL_TABLE_BYTES
    )

    # Grid: token-tiles outer, batch INNER -> pos block index (j, 0) is constant across
    # the inner axis, so Pallas does not re-fetch the positional tile per batch element.
    grid = (s_pad // tile, B)
    pos_spec = pl.BlockSpec((tile, E), lambda j, b, ids: (j, 0))
    out_spec = pl.BlockSpec((1, tile, E), lambda j, b, ids: (b, j, 0))

    if use_vmem_table:
        kernel = _make_vmem_gather_kernel(s_pad, tile)
        tok_spec = pl.BlockSpec((V, E), lambda j, b, ids: (0, 0))   # resident, DMA'd once
        scratch = []
    else:
        kernel = _make_hbm_gather_kernel(s_pad, tile, sub)
        tok_spec = pl.BlockSpec(memory_space=pl.ANY)                # stays in HBM
        scratch = [
            pltpu.VMEM((2, sub, E), tok_table.dtype),   # double-buffered gathered rows
            pltpu.SemaphoreType.DMA((2, sub)),           # one sem per in-flight row DMA
        ]

    grid_spec = pltpu.PrefetchScalarGridSpec(
        num_scalar_prefetch=1,
        grid=grid,
        in_specs=[tok_spec, pos_spec],
        out_specs=out_spec,
        scratch_shapes=scratch,
    )

    out = pl.pallas_call(
        kernel,
        out_shape=jax.ShapeDtypeStruct((B, s_pad, E), tok_table.dtype),
        grid_spec=grid_spec,
        compiler_params=pltpu.CompilerParams(
            dimension_semantics=("parallel", "parallel"),
            # Above v5e's 16 MiB default scoped limit, safely under v7x's 64 MiB physical.
            vmem_limit_bytes=40 * 1024 * 1024,
        ),
    )(ids_flat, tok_table, pos)

    return out[:, :S, :] if s_pad != S else out


def _reference(x, tok_table, pos_table):
    S = x.shape[1]
    return jnp.take(tok_table, x, axis=0) + pos_table[:S][None, :, :]


if __name__ == "__main__":
    key = jax.random.PRNGKey(0)
    k_tok, k_pos, k_ids, k_pos2, k_ids2 = jax.random.split(key, 5)

    # Small shapes consistent with the module.
    vocab_size, embed_size, max_len = 64, 128, 16
    B, S = 2, 8

    # nn.Embedding default init is N(0, 1).
    tok_table = jax.random.normal(k_tok, (vocab_size, embed_size), dtype=jnp.float32)
    pos_table = jax.random.normal(k_pos, (max_len, embed_size), dtype=jnp.float32)
    x = jax.random.randint(k_ids, (B, S), 0, vocab_size, dtype=jnp.int32)
    ref = _reference(x, tok_table, pos_table)

    # 1) Small-table fast path: token table resident in VMEM, in-kernel gather.
    out = jax.block_until_ready(embedding_layer(x, tok_table, pos_table))
    assert out.shape == (B, S, embed_size)
    assert jnp.allclose(out, ref, atol=1e-6, rtol=1e-6)

    # 2) Large-table path (forced) on the same inputs: HBM table + row-gather DMAs.
    out_hbm = jax.block_until_ready(
        embedding_layer(x, tok_table, pos_table, force_hbm_gather=True))
    assert jnp.allclose(out_hbm, ref, atol=1e-6, rtol=1e-6)

    # 3) Longer (still small) sequence so the HBM path runs >1 sub-tile and the
    #    issue(s+1)-before-wait(s) double-buffered pipeline is exercised.
    max_len2, S2 = 64, 32
    pos_table2 = jax.random.normal(k_pos2, (max_len2, embed_size), dtype=jnp.float32)
    x2 = jax.random.randint(k_ids2, (B, S2), 0, vocab_size, dtype=jnp.int32)
    ref2 = _reference(x2, tok_table, pos_table2)
    out2 = jax.block_until_ready(
        embedding_layer(x2, tok_table, pos_table2, force_hbm_gather=True))
    assert jnp.allclose(out2, ref2, atol=1e-6, rtol=1e-6)

    # 4) Non-multiple-of-8 sequence length exercises the padding / slice-off path.
    S3 = 5
    x3 = x[:, :S3]
    ref3 = _reference(x3, tok_table, pos_table)
    out3 = jax.block_until_ready(embedding_layer(x3, tok_table, pos_table))
    assert out3.shape == (B, S3, embed_size)
    assert jnp.allclose(out3, ref3, atol=1e-6, rtol=1e-6)

    print("KERNEL_OK")
</pallas_src>

<mosaic_0001>
module attributes {stable_mosaic.version = 11 : i64} {
  func.func @kernel(%arg0: i32, %arg1: i32, %arg2: memref<16xi32, #tpu.memory_space<smem>>, %arg3: memref<64x128xf32, #tpu.memory_space<vmem>>, %arg4: memref<8x128xf32, #tpu.memory_space<vmem>>, %arg5: memref<1x8x128xf32, #tpu.memory_space<vmem>>) attributes {dimension_semantics = [#tpu.dimension_semantics<parallel>, #tpu.dimension_semantics<parallel>], iteration_bounds = array<i64: 1, 2>, scalar_prefetch = 1 : i64, scratch_operands = 0 : i64, tpu.core_type = #tpu.core_type<tc>, window_params = [{pipeline_mode = #tpu.pipeline_mode<synchronous>, transform_indices = @transform_0, window_bounds = array<i64: 64, 128>}, {transform_indices = @transform_1, window_bounds = array<i64: 8, 128>}, {transform_indices = @transform_2, window_bounds = array<i64: 1, 8, 128>}]} {
    %c8_i32 = arith.constant 8 : i32
    %0 = arith.muli %arg1, %c8_i32 : i32
    %c8_i32_0 = arith.constant 8 : i32
    %1 = arith.muli %arg0, %c8_i32_0 : i32
    %2 = arith.addi %0, %1 : i32
    %c0_i32 = arith.constant 0 : i32
    %3 = arith.addi %2, %c0_i32 : i32
    %c0_i32_1 = arith.constant 0 : i32
    %4 = arith.addi %3, %c0_i32_1 : i32
    %5 = arith.index_cast %4 : i32 to index
    %6 = memref.load %arg2[%5] : memref<16xi32, #tpu.memory_space<smem>>
    %7 = arith.index_cast %6 : i32 to index
    %c0 = arith.constant 0 : index
    %8 = vector.load %arg3[%7, %c0] : memref<64x128xf32, #tpu.memory_space<vmem>>, vector<1x128xf32>
    %c0_i32_2 = arith.constant 0 : i32
    %9 = arith.addi %2, %c0_i32_2 : i32
    %c1_i32 = arith.constant 1 : i32
    %10 = arith.addi %9, %c1_i32 : i32
    %11 = arith.index_cast %10 : i32 to index
    %12 = memref.load %arg2[%11] : memref<16xi32, #tpu.memory_space<smem>>
    %13 = arith.index_cast %12 : i32 to index
    %c0_3 = arith.constant 0 : index
    %14 = vector.load %arg3[%13, %c0_3] : memref<64x128xf32, #tpu.memory_space<vmem>>, vector<1x128xf32>
    %c0_i32_4 = arith.constant 0 : i32
    %15 = arith.addi %2, %c0_i32_4 : i32
    %c2_i32 = arith.constant 2 : i32
    %16 = arith.addi %15, %c2_i32 : i32
    %17 = arith.index_cast %16 : i32 to index
    %18 = memref.load %arg2[%17] : memref<16xi32, #tpu.memory_space<smem>>
    %19 = arith.index_cast %18 : i32 to index
    %c0_5 = arith.constant 0 : index
    %20 = vector.load %arg3[%19, %c0_5] : memref<64x128xf32, #tpu.memory_space<vmem>>, vector<1x128xf32>
    %c0_i32_6 = arith.constant 0 : i32
    %21 = arith.addi %2, %c0_i32_6 : i32
    %c3_i32 = arith.constant 3 : i32
    %22 = arith.addi %21, %c3_i32 : i32
    %23 = arith.index_cast %22 : i32 to index
    %24 = memref.load %arg2[%23] : memref<16xi32, #tpu.memory_space<smem>>
    %25 = arith.index_cast %24 : i32 to index
    %c0_7 = arith.constant 0 : index
    %26 = vector.load %arg3[%25, %c0_7] : memref<64x128xf32, #tpu.memory_space<vmem>>, vector<1x128xf32>
    %c0_i32_8 = arith.constant 0 : i32
    %27 = arith.addi %2, %c0_i32_8 : i32
    %c4_i32 = arith.constant 4 : i32
    %28 = arith.addi %27, %c4_i32 : i32
    %29 = arith.index_cast %28 : i32 to index
    %30 = memref.load %arg2[%29] : memref<16xi32, #tpu.memory_space<smem>>
    %31 = arith.index_cast %30 : i32 to index
    %c0_9 = arith.constant 0 : index
    %32 = vector.load %arg3[%31, %c0_9] : memref<64x128xf32, #tpu.memory_space<vmem>>, vector<1x128xf32>
    %c0_i32_10 = arith.constant 0 : i32
    %33 = arith.addi %2, %c0_i32_10 : i32
    %c5_i32 = arith.constant 5 : i32
    %34 = arith.addi %33, %c5_i32 : i32
    %35 = arith.index_cast %34 : i32 to index
    %36 = memref.load %arg2[%35] : memref<16xi32, #tpu.memory_space<smem>>
    %37 = arith.index_cast %36 : i32 to index
    %c0_11 = arith.constant 0 : index
    %38 = vector.load %arg3[%37, %c0_11] : memref<64x128xf32, #tpu.memory_space<vmem>>, vector<1x128xf32>
    %c0_i32_12 = arith.constant 0 : i32
    %39 = arith.addi %2, %c0_i32_12 : i32
    %c6_i32 = arith.constant 6 : i32
    %40 = arith.addi %39, %c6_i32 : i32
    %41 = arith.index_cast %40 : i32 to index
    %42 = memref.load %arg2[%41] : memref<16xi32, #tpu.memory_space<smem>>
    %43 = arith.index_cast %42 : i32 to index
    %c0_13 = arith.constant 0 : index
    %44 = vector.load %arg3[%43, %c0_13] : memref<64x128xf32, #tpu.memory_space<vmem>>, vector<1x128xf32>
    %c0_i32_14 = arith.constant 0 : i32
    %45 = arith.addi %2, %c0_i32_14 : i32
    %c7_i32 = arith.constant 7 : i32
    %46 = arith.addi %45, %c7_i32 : i32
    %47 = arith.index_cast %46 : i32 to index
    %48 = memref.load %arg2[%47] : memref<16xi32, #tpu.memory_space<smem>>
    %49 = arith.index_cast %48 : i32 to index
    %c0_15 = arith.constant 0 : index
    %50 = vector.load %arg3[%49, %c0_15] : memref<64x128xf32, #tpu.memory_space<vmem>>, vector<1x128xf32>
    %51 = tpu.concatenate %8, %14, %20, %26, %32, %38, %44, %50 in 0 : vector<1x128xf32>, vector<1x128xf32>, vector<1x128xf32>, vector<1x128xf32>, vector<1x128xf32>, vector<1x128xf32>, vector<1x128xf32>, vector<1x128xf32> -> vector<8x128xf32>
    %c0_16 = arith.constant 0 : index
    %c0_17 = arith.constant 0 : index
    %52 = vector.load %arg4[%c0_16, %c0_17] : memref<8x128xf32, #tpu.memory_space<vmem>>, vector<8x128xf32>
    %53 = arith.addf %51, %52 : vector<8x128xf32>
    %c0_18 = arith.constant 0 : index
    %c0_19 = arith.constant 0 : index
    %c0_20 = arith.constant 0 : index
    %54 = vector.load %arg5[%c0_18, %c0_19, %c0_20] : memref<1x8x128xf32, #tpu.memory_space<vmem>>, vector<1x8x128xf32>
    %55 = vector.shape_cast %54 : vector<1x8x128xf32> to vector<8x128xf32>
    %56 = vector.shape_cast %53 : vector<8x128xf32> to vector<1x8x128xf32>
    tpu.vector_store %arg5[%c0_18, %c0_19, %c0_20], %56 {strides = array<i32>} : memref<1x8x128xf32, #tpu.memory_space<vmem>>, vector<1x8x128xf32>,
    return
  }
  func.func @transform_0(%arg0: i32, %arg1: i32, %arg2: memref<16xi32, #tpu.memory_space<smem>>) -> (i32, i32) {
    %c0_i32 = arith.constant 0 : i32
    %c0_i32_0 = arith.constant 0 : i32
    %c0_i32_1 = arith.constant 0 : i32
    return %c0_i32, %c0_i32_0 : i32, i32
  }
  func.func @transform_1(%arg0: i32, %arg1: i32, %arg2: memref<16xi32, #tpu.memory_space<smem>>) -> (i32, i32) {
    %c0_i32 = arith.constant 0 : i32
    %c0_i32_0 = arith.constant 0 : i32
    return %arg0, %c0_i32 : i32, i32
  }
  func.func @transform_2(%arg0: i32, %arg1: i32, %arg2: memref<16xi32, #tpu.memory_space<smem>>) -> (i32, i32, i32) {
    %c0_i32 = arith.constant 0 : i32
    %c0_i32_0 = arith.constant 0 : i32
    return %arg1, %arg0, %c0_i32 : i32, i32, i32
  }
}

</mosaic_0001>

<llo_original>
// kernel: tpu_custom_call.1
$region0: #{tpu_custom_call.1}
  #allocation0 [shape = 'u32[]', space=smem, size = 0x4, offset = 0x4, fixed_abs, tag = 'smem constant byte address 0x4 - core index']
  #allocation1 [shape = 'u32[144,128]{1,0:T(1,128)}', space=vmem, size = 0x12000, scoped, tag = 'internal scratch']
  #allocation2 [shape = 's32[1]{0}', space=sflag, size = 0x4, scoped, tag = 'scoped memory for tpu_custom_call.1']
  #allocation3 [shape = 'u8[512]{0}', space=smem, size = 0x200, scoped, tag = 'prefetched SMEM operand 0']
  %s0 = inlined_call_operand.hbm [shape: s32[16], index: 0, kind: input, shape index: {}]
  %s1 = inlined_call_operand.hbm [shape: f32[64,128], index: 1, kind: input, shape index: {}]
  %s2 = inlined_call_operand.hbm [shape: f32[8,128], index: 2, kind: input, shape index: {}]
  %s3 = inlined_call_operand.hbm [shape: f32[2,8,128], index: 3, kind: output, shape index: {}]
  %s4 = sld [smem:[#allocation0]]
  $region49: #{tpu_custom_call.1} parent=0
    _
  %s6 = ssub.s32 1, %s4
  %s7 = scalar_select 0, %s6, %s4
  %9 = dma.hbm_to_smem %s0, 16, [#allocation3], [#allocation2]
  %10 = dma.done [#allocation2], 16
  %11 = sfence
  $region1: #{tpu_custom_call.1} parent=0
    #allocation4 [shape = 'u8[32768]{0}', space=vmem, size = 0x8000, scoped, tag = 'input window, operand 1, single buffered']
    #allocation5 [shape = 's32[2]{0}', space=sflag, size = 0x8, scoped, tag = 'scoped memory for tpu_custom_call.1']
    #allocation6 [shape = 's32[2]{0}', space=sflag, size = 0x8, scoped, tag = 'scoped memory for tpu_custom_call.1']
    #allocation7 [shape = 'u8[4096]{0}', space=vmem, size = 0x1000, scoped, tag = 'input window, operand 2, single buffered']
    #allocation8 [shape = 's32[1]{0}', space=sflag, size = 0x4, scoped, tag = 'scoped memory for tpu_custom_call.1']
    #allocation9 [shape = 'u8[8192]{0}', space=vmem, size = 0x2000, scoped, tag = 'output window, operand 0']
    %12 = vsyncpa [#allocation5], 0
    %13 = vsyncpa [#allocation8], 0
    %14 = vsyncpa [#allocation6], 0
    %s15 = scalar_lea.sflag [#allocation6], 1
    %16 = vsyncpa %s15, 0
    loop: start=0, step=1, limit=4
    $region2: #{tpu_custom_call.1} parent=1 // loop_pre_header
      _
    $region3: #{tpu_custom_call.1} parent=1 // loop_header
      %s18 = sphi 0, %s22
      %p19 = scmp.ge.s32.totalorder %s18, 4
      %s25 = sphi 0, %s37
      %s26 = sphi 0, %s33
      %s27 = sphi 0, %s25
      %s28 = sphi 0, %s26
      %s29 = sphi 0, %s27
      %s30 = sphi 0, %s28
      %s38 = sphi 0, %s38
      %s40 = sphi 0, %s38
      %s41 = sphi 0, %s40
      %s55 = sphi 0, %s41
      %s61 = sphi 0, %s63
      %s64 = sphi 0, %s61
      %s65 = sphi 0, %s64
      %s81 = sphi 0, %s65
      %s89 = sphi 0, %s91
      %s92 = sphi 0, %s89
      %s93 = sphi 0, %s92
      %s109 = sphi 0, %s93
    $region4: #{tpu_custom_call.1} parent=1 // loop_header_branch
      %21 = sbr.rel (%p19) target = $region8
    $region5: #{tpu_custom_call.1} parent=1 // loop_body
      %s23 = ssub.s32 %s18, 1
      %s24 = ssub.s32 %s18, 2
      %s31 = sadd.s32 1, %s26
      %p32 = scmp.ge.s32.totalorder %s31, 2
      %s33 = scalar_select %p32, 0, %s31
      %s34 = sadd.s32 1, %s25
      %s35 = scalar_select %p32, %s34, %s25
      %p36 = scmp.ge.s32.totalorder %s35, 1
      %s37 = scalar_select %p36, 0, %s35
      %s39 = sadd.s32 %s38, 1
      %p42 = scmp.eq.s32.totalorder %s18, 1
      %p43 = scmp.ne.s32.totalorder %s38, %s40
      %p44 = scmp.eq.s32.totalorder %s18, 0
      %p45 = por %p43, %p44
      %p46 = scmp.ne.s32.totalorder %s38, %s40
      %p47 = scmp.eq.s32.totalorder %s23, 1
      %p48 = por %p46, %p47
      %p49 = scmp.ne.s32.totalorder %s40, %s41
      %p50 = scmp.eq.s32.totalorder %s23, 0
      %p51 = por %p49, %p50
      %p52 = scmp.ne.s32.totalorder %s40, %s41
      %p53 = scmp.eq.s32.totalorder %s24, 1
      %p54 = por %p52, %p53
      %p56 = scmp.ne.s32.totalorder %s41, %s55
      %p57 = scmp.eq.s32.totalorder %s24, 0
      %p58 = por %p56, %p57
      %s59 = ssub.s32 %s25, %s37
      %p60 = scmp.eq.s32.totalorder %s59, 0
      %s62 = sadd.s32 %s61, 1
      %s63 = scalar_select %p60, %s61, %s62
      %p66 = pneg %p60
      %p67 = scmp.eq.s32.totalorder %s18, 1
      %p68 = por %p66, %p67
      %p69 = scmp.ne.s32.totalorder %s61, %s64
      %p70 = scmp.eq.s32.totalorder %s18, 0
      %p71 = por %p69, %p70
      %p72 = scmp.ne.s32.totalorder %s61, %s64
      %p73 = scmp.eq.s32.totalorder %s23, 1
      %p74 = por %p72, %p73
      %p75 = scmp.ne.s32.totalorder %s64, %s65
      %p76 = scmp.eq.s32.totalorder %s23, 0
      %p77 = por %p75, %p76
      %p78 = scmp.ne.s32.totalorder %s64, %s65
      %p79 = scmp.eq.s32.totalorder %s24, 1
      %p80 = por %p78, %p79
      %p82 = scmp.ne.s32.totalorder %s65, %s81
      %p83 = scmp.eq.s32.totalorder %s24, 0
      %p84 = por %p82, %p83
      %s85 = ssub.s32 %s26, %s33
      %s86 = ssub.s32 %s25, %s37
      %s87 = sor.u32 %s85, %s86
      %p88 = scmp.eq.s32.totalorder %s87, 0
      %s90 = sadd.s32 %s89, 1
      %s91 = scalar_select %p88, %s89, %s90
      %p94 = pneg %p88
      %p95 = scmp.eq.s32.totalorder %s18, 1
      %p96 = por %p94, %p95
      %p97 = scmp.ne.s32.totalorder %s89, %s92
      %p98 = scmp.eq.s32.totalorder %s18, 0
      %p99 = por %p97, %p98
      %p100 = scmp.ne.s32.totalorder %s89, %s92
      %p101 = scmp.eq.s32.totalorder %s23, 1
      %p102 = por %p100, %p101
      %p103 = scmp.ne.s32.totalorder %s92, %s93
      %p104 = scmp.eq.s32.totalorder %s23, 0
      %p105 = por %p103, %p104
      %p106 = scmp.ne.s32.totalorder %s92, %s93
      %p107 = scmp.eq.s32.totalorder %s24, 1
      %p108 = por %p106, %p107
      %p110 = scmp.ne.s32.totalorder %s93, %s109
      %p111 = scmp.eq.s32.totalorder %s24, 0
      %p112 = por %p110, %p111
      %p113 = scmp.le.s32.totalorder 1, %s18
      %p114 = scmp.lt.s32.totalorder %s18, 3
      %p115 = pnand %p113, %p114
      %p116 = pneg %p115
      // Predicated region
      $region9: #{tpu_custom_call.1} parent=5 // pred_check
        _
      $region10: #{tpu_custom_call.1} parent=5 // pred_check_branch
        %118 = sbr.rel (%p115) target = $region12
      $region11: #{tpu_custom_call.1} parent=5 // pred_region
        %s119 = ssub.s32 %s18, 1
        // Predicated region
        $region13: #{tpu_custom_call.1} parent=11 // pred_check
          %p120 = pneg %p51
        $region14: #{tpu_custom_call.1} parent=11 // pred_check_branch
          %122 = sbr.rel (%p120) target = $region16
        $region15: #{tpu_custom_call.1} parent=11 // pred_region
          %s124 = ssub.s32 1024, 1024
          %125 = vsyncadd [#allocation5], %s124
          %s126 = sshll.u32 [#allocation4], 4
          %s127 = int_to_ptr.vmem [resolvable:$true] %s126
          %132 = dma.hbm_to_vmem [thread:$0]  %s1, 1024, %s127, [#allocation5], 128, 128, 8
        $region16: #{tpu_custom_call.1} parent=11 // pred_fallthru
          _
        // Predicated region
        $region17: #{tpu_custom_call.1} parent=11 // pred_check
          %p133 = pneg %p77
        $region18: #{tpu_custom_call.1} parent=11 // pred_check_branch
          %135 = sbr.rel (%p133) target = $region20
        $region19: #{tpu_custom_call.1} parent=11 // pred_region
          %s137 = ssub.s32 128, 128
          %138 = vsyncadd [#allocation8], %s137
          %s139 = smul.addr %s27, 128
          %s140 = scalar_lea.hbm %s2, %s139
          %s142 = sshll.u32 [#allocation7], 4
          %s143 = int_to_ptr.vmem [resolvable:$true] %s142
          %145 = dma.hbm_to_vmem [thread:$0]  %s140, 128, %s143, [#allocation8]
        $region20: #{tpu_custom_call.1} parent=11 // pred_fallthru
          _
      $region12: #{tpu_custom_call.1} parent=5 // pred_fallthru
        _
      %p146 = scmp.lt.s32.totalorder %s18, 2
      // Predicated region
      $region21: #{tpu_custom_call.1} parent=5 // pred_check
        %p147 = pneg %p146
      $region22: #{tpu_custom_call.1} parent=5 // pred_check_branch
        %149 = sbr.rel (%p147) target = $region24
      $region23: #{tpu_custom_call.1} parent=5 // pred_region
        _
      $region24: #{tpu_custom_call.1} parent=5 // pred_fallthru
        _
      %p150 = scmp.le.s32.totalorder 1, %s18
      %p151 = scmp.lt.s32.totalorder %s18, 3
      %p152 = pnand %p150, %p151
      %p153 = pneg %p152
      // Predicated region
      $region25: #{tpu_custom_call.1} parent=5 // pred_check
        _
      $region26: #{tpu_custom_call.1} parent=5 // pred_check_branch
        %155 = sbr.rel (%p152) target = $region28
      $region27: #{tpu_custom_call.1} parent=5 // pred_region
        %s156 = ssub.s32 %s18, 1
        // Predicated region
        $region29: #{tpu_custom_call.1} parent=27 // pred_check
          %p157 = pneg %p51
        $region30: #{tpu_custom_call.1} parent=27 // pred_check_branch
          %159 = sbr.rel (%p157) target = $region32
        $region31: #{tpu_custom_call.1} parent=27 // pred_region
          %160 = dma.done [#allocation5], 1024
        $region32: #{tpu_custom_call.1} parent=27 // pred_fallthru
          _
        // Predicated region
        $region33: #{tpu_custom_call.1} parent=27 // pred_check
          %p161 = pneg %p77
        $region34: #{tpu_custom_call.1} parent=27 // pred_check_branch
          %163 = sbr.rel (%p161) target = $region36
        $region35: #{tpu_custom_call.1} parent=27 // pred_region
          %164 = dma.done [#allocation8], 128
        $region36: #{tpu_custom_call.1} parent=27 // pred_fallthru
          _
        %p165 = pneg %p51
        %p166 = pneg %p48
        %p167 = pneg %p77
        %p168 = pneg %p74
        %p169 = pneg %p105
        %p170 = pneg %p102
        %s171 = sand.u32 %s92, 1
        %s172 = scalar_lea.sflag [#allocation6], %s171
        %s173 = sand.u32 %s92, 1
        %s174 = smul.addr %s173, 8
        %s175 = scalar_lea.vmem [#allocation9], %s174
        %s176 = smul.u32 %s28, 8
        %s177 = smul.u32 %s27, 8
        %s178 = sadd.s32 %s176, %s177
        %s179 = sld [smem:[#allocation3 + %s178]]
        %s180 = scalar_lea.vmem [#allocation4], %s179
        %v181 = vld [vmem:[%s180] sm:$0x1]
        %s182 = sadd.s32 %s178, 1
        %s183 = sld [smem:[#allocation3 + %s182]]
        %s184 = scalar_lea.vmem [#allocation4], %s183
        %v185 = vld [vmem:[%s184] sm:$0x1]
        %s186 = sadd.s32 %s178, 2
        %s187 = sld [smem:[#allocation3 + %s186]]
        %s188 = scalar_lea.vmem [#allocation4], %s187
        %v189 = vld [vmem:[%s188] sm:$0x1]
        %s190 = sadd.s32 %s178, 3
        %s191 = sld [smem:[#allocation3 + %s190]]
        %s192 = scalar_lea.vmem [#allocation4], %s191
        %v193 = vld [vmem:[%s192] sm:$0x1]
        %s194 = sadd.s32 %s178, 4
        %s195 = sld [smem:[#allocation3 + %s194]]
        %s196 = scalar_lea.vmem [#allocation4], %s195
        %v197 = vld [vmem:[%s196] sm:$0x1]
        %s198 = sadd.s32 %s178, 5
        %s199 = sld [smem:[#allocation3 + %s198]]
        %s200 = scalar_lea.vmem [#allocation4], %s199
        %v201 = vld [vmem:[%s200] sm:$0x1]
        %s202 = sadd.s32 %s178, 6
        %s203 = sld [smem:[#allocation3 + %s202]]
        %s204 = scalar_lea.vmem [#allocation4], %s203
        %v205 = vld [vmem:[%s204] sm:$0x1]
        %s206 = sadd.s32 %s178, 7
        %s207 = sld [smem:[#allocation3 + %s206]]
        %s208 = scalar_lea.vmem [#allocation4], %s207
        %v209 = vld [vmem:[%s208] sm:$0x1]
        %v211 = vrot.slane %v185, 7
        %v214 = vrot.slane %v189, 6
        %v217 = vrot.slane %v193, 5
        %v220 = vrot.slane %v197, 4
        %v223 = vrot.slane %v201, 3
        %v226 = vrot.slane %v205, 2
        %v229 = vrot.slane %v209, 1
        %vm231 = vcmask 1040384
        %v232 = vsel %vm231, %v181, %v211
        %vm233 = vcmask 1041408
        %v234 = vsel %vm233, %v232, %v214
        %vm235 = vcmask 1042432
        %v236 = vsel %vm235, %v234, %v217
        %vm237 = vcmask 1043456
        %v238 = vsel %vm237, %v236, %v220
        %vm239 = vcmask 1044480
        %v240 = vsel %vm239, %v238, %v223
        %vm241 = vcmask 1045504
        %v242 = vsel %vm241, %v240, %v226
        %vm243 = vcmask 1046528
        %v244 = vsel %vm243, %v242, %v229
        %v245 = vld [vmem:[#allocation7] sm:$0xff]
        %v246 = vadd.f32 %v244, %v245
        %247 = vst [vmem:[%s175] sm:$0xff] %v246
        %s248 = sand.u32 %s92, 1
        %s249 = scalar_lea.sflag [#allocation6], %s248
        %s250 = sand.u32 %s92, 1
        %s251 = smul.addr %s250, 8
        %s252 = scalar_lea.vmem [#allocation9], %s251
        // Predicated region
        $region37: #{tpu_custom_call.1} parent=27 // pred_check
          %p253 = pneg %p102
        $region38: #{tpu_custom_call.1} parent=27 // pred_check_branch
          %255 = sbr.rel (%p253) target = $region40
        $region39: #{tpu_custom_call.1} parent=27 // pred_region
          %s257 = ssub.s32 128, 128
          %258 = vsyncadd %s249, %s257
          %s259 = sadd.s32 %s27, %s28
          %s260 = smul.addr %s259, 128
          %s261 = scalar_lea.hbm %s3, %s260
          %s263 = sshll.u32 %s252, 4
          %s264 = int_to_ptr.vmem [resolvable:$true] %s263
          %266 = dma.vmem_to_hbm [thread:$0]  %s264, 128, %s261, %s249
        $region40: #{tpu_custom_call.1} parent=27 // pred_fallthru
          _
      $region28: #{tpu_custom_call.1} parent=5 // pred_fallthru
        _
      %p267 = scmp.le.s32.totalorder 2, %s18
      // Predicated region
      $region41: #{tpu_custom_call.1} parent=5 // pred_check
        %p268 = pneg %p267
      $region42: #{tpu_custom_call.1} parent=5 // pred_check_branch
        %270 = sbr.rel (%p268) target = $region44
      $region43: #{tpu_custom_call.1} parent=5 // pred_region
        %s271 = ssub.s32 %s18, 2
        // Predicated region
        $region45: #{tpu_custom_call.1} parent=43 // pred_check
          %p272 = pneg %p108
        $region46: #{tpu_custom_call.1} parent=43 // pred_check_branch
          %274 = sbr.rel (%p272) target = $region48
        $region47: #{tpu_custom_call.1} parent=43 // pred_region
          %s275 = sand.u32 %s93, 1
          %s276 = scalar_lea.sflag [#allocation6], %s275
          %s277 = sand.u32 %s93, 1
          %s278 = smul.addr %s277, 8
          %s279 = scalar_lea.vmem [#allocation9], %s278
          %280 = dma.done %s276, 128
        $region48: #{tpu_custom_call.1} parent=43 // pred_fallthru
          _
      $region44: #{tpu_custom_call.1} parent=5 // pred_fallthru
        _
    $region6: #{tpu_custom_call.1} parent=1 // loop_footer
      %s22 = sadd.s32 1, %s18
    $region7: #{tpu_custom_call.1} parent=1 // loop_footer_branch
      %17 = sbr.rel target = $region3
    $region8: #{tpu_custom_call.1} parent=1 // loop_exit
      _
    %281 = vsyncpa [#allocation5], 1
    %s282 = scalar_lea.sflag [#allocation5], 1
    %283 = vsyncpa %s282, 1
    %284 = vsyncpa [#allocation8], 1
    %285 = vsyncpa [#allocation6], 1
    %s286 = scalar_lea.sflag [#allocation6], 1
    %287 = vsyncpa %s286, 1

</llo_original>
